<compile_context>
chip_gen: v7x
topology: tpu7x:2x2x1
jax: 0.10.0
libtpu: 0.0.40
codegen_flags: <defaults>
</compile_context>

<pallas_src>
import functools

import jax
import jax.numpy as jnp
from jax.experimental import pallas as pl
from jax.experimental.pallas import tpu as pltpu

# ----------------------------- config (small) -------------------------------
MODE = "multichannel"          # uses static + non-static embeddings, C_in = 2
WORDS_NUM = 100
EMBED_NUM = 100
WORDS_DIM = 32                 # must equal EMBED_DIM (conv kernel spans full width)
EMBED_DIM = 32
OUTPUT_CHANNEL = 8
TARGET_CLASS = 5
BATCH = 2
SEQ = 8
KS = (3, 4, 5)
PADS = (2, 3, 4)               # padding=(K-1, 0) in the PyTorch convs
KMAX = max(KS)
PAD_MAX = max(PADS)
C_IN = 2 if MODE == "multichannel" else 1

NOC = 3 * OUTPUT_CHANNEL       # 24 real conv-feature columns
NOCP = 128                     # lane-padded conv-feature columns
TCP = 128                      # lane-padded logits columns

CONV_DTYPE = jnp.bfloat16      # MXU operand dtype for the conv stage (f32 accumulate)


# ------------------------------ Pallas kernel -------------------------------
def kimcnn_kernel(x_ref, wc_ref, bc_ref, mask_ref, wfc_ref, bfc_ref, out_ref, *, lp):
    # x_ref   : (bb, Sp, CD)      f32, PAD_MAX-padded activations, CD = C_in*D
    # wc_ref  : (KMAX, CD, NOCP)  bf16 fused conv weights (zero-padded taps/lanes)
    # bc_ref  : (1, NOCP)         f32 fused conv biases (lane-padded)
    # mask_ref: (lp, NOCP)        f32 0/1 time-validity mask (precomputed)
    # wfc_ref : (NOCP, TCP)       f32 FC weight (zero-padded)
    # bfc_ref : (1, TCP)          f32 FC bias   (zero-padded)
    # out_ref : (bb, TCP)         f32 lane-dense logits block
    bb = x_ref.shape[0]
    cd = x_ref.shape[2]
    nocp = wc_ref.shape[2]

    # Conv stage: KMAX shifted-window (tap) matmuls accumulated in f32.  Each
    # window slice is cast to bf16 right before the MXU so it runs at full
    # bf16 rate while all VPU work stays on the f32 accumulator.
    acc = jnp.zeros((bb * lp, nocp), jnp.float32)
    for kh in range(KMAX):
        xk = x_ref[:, kh:kh + lp, :].reshape(bb * lp, cd).astype(CONV_DTYPE)
        acc += jnp.dot(xk, wc_ref[kh], preferred_element_type=jnp.float32)

    acc = jnp.maximum(acc + bc_ref[...], 0.0)                    # bias + ReLU

    # Mask invalid time steps (Lout_j = S + 2 + j per conv, plus sublane
    # padding rows and the lane-padded columns) and max-pool over time.
    # ReLU output >= 0, so multiplying by the 0/1 mask is exact for the max.
    pooled = jnp.max(acc.reshape(bb, lp, nocp) * mask_ref[...], axis=1)

    # Dropout is identity in eval mode; final FC on the lane-padded features.
    out_ref[...] = (jnp.dot(pooled, wfc_ref[...],
                            preferred_element_type=jnp.float32) + bfc_ref[...])


# ------------------------------- wrapper ------------------------------------
def _fused_conv_weight(params):
    # Per-conv (OC, C_in, K, D)  ->  fused (KMAX, C_in*D, NOCP).
    # Conv j's taps are placed at tap positions KMAX-K_j .. KMAX-1 so all three
    # convs read the same KMAX-tap window of the PAD_MAX-padded input.
    ws = []
    for name, k in (("w1", 3), ("w2", 4), ("w3", 5)):
        ws.append(jnp.pad(params[name], ((0, 0), (0, 0), (KMAX - k, 0), (0, 0))))
    w_all = jnp.stack(ws, axis=0)                       # (3, OC, C, KMAX, D)
    w_all = jnp.transpose(w_all, (3, 2, 4, 0, 1))       # (KMAX, C, D, 3, OC)
    w_all = w_all.reshape(KMAX, C_IN * WORDS_DIM, NOC)
    return jnp.pad(w_all, ((0, 0), (0, 0), (0, NOCP - NOC)))     # lane-pad to 128


def kimcnn_forward(ids, params):
    # Embedding lookups (gather glue) + channel stacking, matching PyTorch modes.
    if MODE == "rand":
        x = jnp.take(params["embed"], ids, axis=0)[:, None]                  # (B,1,S,D)
    elif MODE == "static":
        x = jnp.take(params["static_embed"], ids, axis=0)[:, None]
    elif MODE == "non-static":
        x = jnp.take(params["non_static_embed"], ids, axis=0)[:, None]
    elif MODE == "multichannel":
        ns = jnp.take(params["non_static_embed"], ids, axis=0)
        st = jnp.take(params["static_embed"], ids, axis=0)
        x = jnp.stack([ns, st], axis=1)                                      # (B,2,S,D)
    else:
        raise ValueError("Unsupported Mode")
    x = x.astype(jnp.float32)
    B, C, S, D = x.shape
    cd = C * D                                           # 64

    lmax = S + 2 * PAD_MAX - KMAX + 1                    # longest conv output (= S + 4)
    lp = (lmax + 7) // 8 * 8                             # sublane-aligned pooled rows
    sp = ((lp + KMAX - 1 + 7) // 8) * 8                  # padded time length kernel reads
    sp = max(sp, S + 2 * PAD_MAX)

    # (B, Sp, C*D) padded activations: PAD_MAX zeros on the left, zeros up to
    # `sp` on the right; feature index is c*D + d (matches fused weight rows).
    x_t = jnp.transpose(x, (0, 2, 1, 3)).reshape(B, S, cd)
    x_pad = jnp.pad(x_t, ((0, 0), (PAD_MAX, sp - S - PAD_MAX), (0, 0)))

    # Fused conv weight / bias (lane-padded, bf16 operands for the MXU).
    wc = _fused_conv_weight(params).astype(CONV_DTYPE)                       # (KMAX,CD,NOCP)
    bc = jnp.pad(jnp.concatenate([params["b1"], params["b2"], params["b3"]]),
                 (0, NOCP - NOC)).reshape(1, NOCP).astype(jnp.float32)

    # Precomputed time-validity mask: valid iff real column and t < S + 2 + j.
    t_idx = jnp.arange(lp)[:, None]
    c_idx = jnp.arange(NOCP)[None, :]
    mask = ((c_idx < NOC) &
            (t_idx < S + 2 + c_idx // OUTPUT_CHANNEL)).astype(jnp.float32)   # (lp, NOCP)

    # FC weight/bias, zero-padded to lane-dense (NOCP, TCP) / (1, TCP).
    wfc = jnp.pad(params["wfc"].T.astype(jnp.float32),
                  ((0, NOCP - NOC), (0, TCP - TARGET_CLASS)))
    bfc = jnp.pad(params["bfc"].astype(jnp.float32),
                  (0, TCP - TARGET_CLASS)).reshape(1, TCP)

    # Batch blocking: ~1024 matmul rows per grid step; pad B to a multiple of
    # the block (fixed-size blocks, bounded VMEM); keep >= 2 "parallel" steps
    # at larger batch so v7x's two TensorCores both get work.
    bb = max(1, min(B, 1024 // lp))
    if B >= 16 and B < 2 * bb:
        bb = (B + 1) // 2
    b_pad = ((B + bb - 1) // bb) * bb
    if b_pad > B:
        x_pad = jnp.pad(x_pad, ((0, b_pad - B), (0, 0), (0, 0)))

    kernel = functools.partial(kimcnn_kernel, lp=lp)
    out = pl.pallas_call(
        kernel,
        out_shape=jax.ShapeDtypeStruct((b_pad, TCP), jnp.float32),
        grid=(b_pad // bb,),
        in_specs=[
            pl.BlockSpec((bb, sp, cd), lambda i: (i, 0, 0)),
            pl.BlockSpec((KMAX, cd, NOCP), lambda i: (0, 0, 0)),
            pl.BlockSpec((1, NOCP), lambda i: (0, 0)),
            pl.BlockSpec((lp, NOCP), lambda i: (0, 0)),
            pl.BlockSpec((NOCP, TCP), lambda i: (0, 0)),
            pl.BlockSpec((1, TCP), lambda i: (0, 0)),
        ],
        out_specs=pl.BlockSpec((bb, TCP), lambda i: (i, 0)),
        compiler_params=pltpu.CompilerParams(dimension_semantics=("parallel",)),
    )(x_pad, wc, bc, mask, wfc, bfc)

    return out[:B, :TARGET_CLASS]


# --------------------------- pure-JAX reference -----------------------------
def kimcnn_reference(ids, params):
    ns = jnp.take(params["non_static_embed"], ids, axis=0)
    st = jnp.take(params["static_embed"], ids, axis=0)
    x = jnp.stack([ns, st], axis=1).astype(jnp.float32)                      # (B,2,S,D)
    feats = []
    for (w, b, pad) in ((params["w1"], params["b1"], 2),
                        (params["w2"], params["b2"], 3),
                        (params["w3"], params["b3"], 4)):
        y = jax.lax.conv_general_dilated(
            x, w, window_strides=(1, 1), padding=((pad, pad), (0, 0)),
            dimension_numbers=("NCHW", "OIHW", "NCHW"))                      # (B,OC,L,1)
        y = jnp.maximum(y + b[None, :, None, None], 0.0)[:, :, :, 0]
        feats.append(jnp.max(y, axis=2))                                     # (B,OC)
    feat = jnp.concatenate(feats, axis=1)                                    # (B,3*OC)
    return feat @ params["wfc"].T + params["bfc"]


# ---------------------------------- main -------------------------------------
def init_params(key):
    ks = jax.random.split(key, 12)
    f = jnp.float32
    return {
        "embed":            0.1 * jax.random.normal(ks[0], (WORDS_NUM, WORDS_DIM), f),
        "static_embed":     0.1 * jax.random.normal(ks[1], (EMBED_NUM, EMBED_DIM), f),
        "non_static_embed": 0.1 * jax.random.normal(ks[2], (EMBED_NUM, EMBED_DIM), f),
        "w1": 0.1 * jax.random.normal(ks[3], (OUTPUT_CHANNEL, C_IN, 3, WORDS_DIM), f),
        "b1": 0.1 * jax.random.normal(ks[4], (OUTPUT_CHANNEL,), f),
        "w2": 0.1 * jax.random.normal(ks[5], (OUTPUT_CHANNEL, C_IN, 4, WORDS_DIM), f),
        "b2": 0.1 * jax.random.normal(ks[6], (OUTPUT_CHANNEL,), f),
        "w3": 0.1 * jax.random.normal(ks[7], (OUTPUT_CHANNEL, C_IN, 5, WORDS_DIM), f),
        "b3": 0.1 * jax.random.normal(ks[8], (OUTPUT_CHANNEL,), f),
        "wfc": 0.1 * jax.random.normal(ks[9], (TARGET_CLASS, NOC), f),
        "bfc": 0.1 * jax.random.normal(ks[10], (TARGET_CLASS,), f),
    }


if __name__ == "__main__":
    key = jax.random.PRNGKey(0)
    k_ids, k_par = jax.random.split(key)
    params = init_params(k_par)
    ids = jax.random.randint(k_ids, (BATCH, SEQ), 0, EMBED_NUM, dtype=jnp.int32)

    logits = jax.block_until_ready(kimcnn_forward(ids, params))
    ref = jax.block_until_ready(kimcnn_reference(ids, params))

    assert logits.shape == (BATCH, TARGET_CLASS), logits.shape
    # bf16 conv-stage operands (f32 accumulation) vs f32 reference -> loosened tol.
    if not jnp.allclose(logits, ref, atol=1e-2, rtol=1e-2):
        raise AssertionError(f"mismatch vs reference:\n{logits}\n{ref}")
    print("KERNEL_OK")
</pallas_src>

<mosaic_0001>
module attributes {stable_mosaic.version = 11 : i64} {
  func.func @kimcnn_kernel(%arg0: i32, %arg1: memref<2x24x64xf32, #tpu.memory_space<vmem>>, %arg2: memref<5x64x128xbf16, #tpu.memory_space<vmem>>, %arg3: memref<1x128xf32, #tpu.memory_space<vmem>>, %arg4: memref<16x128xf32, #tpu.memory_space<vmem>>, %arg5: memref<128x128xf32, #tpu.memory_space<vmem>>, %arg6: memref<1x128xf32, #tpu.memory_space<vmem>>, %arg7: memref<2x128xf32, #tpu.memory_space<vmem>>) attributes {dimension_semantics = [#tpu.dimension_semantics<parallel>], iteration_bounds = array<i64: 1>, scalar_prefetch = 0 : i64, scratch_operands = 0 : i64, tpu.core_type = #tpu.core_type<tc>, window_params = [{transform_indices = @transform_0, window_bounds = array<i64: 2, 24, 64>}, {pipeline_mode = #tpu.pipeline_mode<synchronous>, transform_indices = @transform_1, window_bounds = array<i64: 5, 64, 128>}, {pipeline_mode = #tpu.pipeline_mode<synchronous>, transform_indices = @transform_2, window_bounds = array<i64: 1, 128>}, {pipeline_mode = #tpu.pipeline_mode<synchronous>, transform_indices = @transform_3, window_bounds = array<i64: 16, 128>}, {pipeline_mode = #tpu.pipeline_mode<synchronous>, transform_indices = @transform_4, window_bounds = array<i64: 128, 128>}, {pipeline_mode = #tpu.pipeline_mode<synchronous>, transform_indices = @transform_5, window_bounds = array<i64: 1, 128>}, {transform_indices = @transform_6, window_bounds = array<i64: 2, 128>}]} {
    %cst = arith.constant 0.000000e+00 : f32
    %0 = vector.broadcast %cst : f32 to vector<32x128xf32>
    %c0 = arith.constant 0 : index
    %c0_0 = arith.constant 0 : index
    %c0_1 = arith.constant 0 : index
    %1 = vector.load %arg1[%c0, %c0_0, %c0_1] : memref<2x24x64xf32, #tpu.memory_space<vmem>>, vector<2x16x64xf32>
    %2 = vector.shape_cast %1 : vector<2x16x64xf32> to vector<32x64xf32>
    %3 = arith.truncf %2 : vector<32x64xf32> to vector<32x64xbf16>
    %c0_2 = arith.constant 0 : index
    %c0_3 = arith.constant 0 : index
    %c0_4 = arith.constant 0 : index
    %4 = vector.load %arg2[%c0_2, %c0_3, %c0_4] : memref<5x64x128xbf16, #tpu.memory_space<vmem>>, vector<1x64x128xbf16>
    %5 = vector.shape_cast %4 : vector<1x64x128xbf16> to vector<64x128xbf16>
    %cst_5 = arith.constant dense<0.000000e+00> : vector<32x128xf32>
    %6 = tpu.matmul %3, %5, %cst_5 {dimension_numbers = #tpu.dot_dimension_numbers<[1], [0], [0], [1], [0, 0, 1, 1], [], []>} : vector<32x64xbf16>, vector<64x128xbf16>, vector<32x128xf32> -> vector<32x128xf32>
    %7 = arith.addf %0, %6 : vector<32x128xf32>
    %c0_6 = arith.constant 0 : index
    %c1 = arith.constant 1 : index
    %c0_7 = arith.constant 0 : index
    %8 = vector.load %arg1[%c0_6, %c1, %c0_7] : memref<2x24x64xf32, #tpu.memory_space<vmem>>, vector<2x16x64xf32>
    %9 = vector.shape_cast %8 : vector<2x16x64xf32> to vector<32x64xf32>
    %10 = arith.truncf %9 : vector<32x64xf32> to vector<32x64xbf16>
    %c1_8 = arith.constant 1 : index
    %c0_9 = arith.constant 0 : index
    %c0_10 = arith.constant 0 : index
    %11 = vector.load %arg2[%c1_8, %c0_9, %c0_10] : memref<5x64x128xbf16, #tpu.memory_space<vmem>>, vector<1x64x128xbf16>
    %12 = vector.shape_cast %11 : vector<1x64x128xbf16> to vector<64x128xbf16>
    %cst_11 = arith.constant dense<0.000000e+00> : vector<32x128xf32>
    %13 = tpu.matmul %10, %12, %cst_11 {dimension_numbers = #tpu.dot_dimension_numbers<[1], [0], [0], [1], [0, 0, 1, 1], [], []>} : vector<32x64xbf16>, vector<64x128xbf16>, vector<32x128xf32> -> vector<32x128xf32>
    %14 = arith.addf %7, %13 : vector<32x128xf32>
    %c0_12 = arith.constant 0 : index
    %c2 = arith.constant 2 : index
    %c0_13 = arith.constant 0 : index
    %15 = vector.load %arg1[%c0_12, %c2, %c0_13] : memref<2x24x64xf32, #tpu.memory_space<vmem>>, vector<2x16x64xf32>
    %16 = vector.shape_cast %15 : vector<2x16x64xf32> to vector<32x64xf32>
    %17 = arith.truncf %16 : vector<32x64xf32> to vector<32x64xbf16>
    %c2_14 = arith.constant 2 : index
    %c0_15 = arith.constant 0 : index
    %c0_16 = arith.constant 0 : index
    %18 = vector.load %arg2[%c2_14, %c0_15, %c0_16] : memref<5x64x128xbf16, #tpu.memory_space<vmem>>, vector<1x64x128xbf16>
    %19 = vector.shape_cast %18 : vector<1x64x128xbf16> to vector<64x128xbf16>
    %cst_17 = arith.constant dense<0.000000e+00> : vector<32x128xf32>
    %20 = tpu.matmul %17, %19, %cst_17 {dimension_numbers = #tpu.dot_dimension_numbers<[1], [0], [0], [1], [0, 0, 1, 1], [], []>} : vector<32x64xbf16>, vector<64x128xbf16>, vector<32x128xf32> -> vector<32x128xf32>
    %21 = arith.addf %14, %20 : vector<32x128xf32>
    %c0_18 = arith.constant 0 : index
    %c3 = arith.constant 3 : index
    %c0_19 = arith.constant 0 : index
    %22 = vector.load %arg1[%c0_18, %c3, %c0_19] : memref<2x24x64xf32, #tpu.memory_space<vmem>>, vector<2x16x64xf32>
    %23 = vector.shape_cast %22 : vector<2x16x64xf32> to vector<32x64xf32>
    %24 = arith.truncf %23 : vector<32x64xf32> to vector<32x64xbf16>
    %c3_20 = arith.constant 3 : index
    %c0_21 = arith.constant 0 : index
    %c0_22 = arith.constant 0 : index
    %25 = vector.load %arg2[%c3_20, %c0_21, %c0_22] : memref<5x64x128xbf16, #tpu.memory_space<vmem>>, vector<1x64x128xbf16>
    %26 = vector.shape_cast %25 : vector<1x64x128xbf16> to vector<64x128xbf16>
    %cst_23 = arith.constant dense<0.000000e+00> : vector<32x128xf32>
    %27 = tpu.matmul %24, %26, %cst_23 {dimension_numbers = #tpu.dot_dimension_numbers<[1], [0], [0], [1], [0, 0, 1, 1], [], []>} : vector<32x64xbf16>, vector<64x128xbf16>, vector<32x128xf32> -> vector<32x128xf32>
    %28 = arith.addf %21, %27 : vector<32x128xf32>
    %c0_24 = arith.constant 0 : index
    %c4 = arith.constant 4 : index
    %c0_25 = arith.constant 0 : index
    %29 = vector.load %arg1[%c0_24, %c4, %c0_25] : memref<2x24x64xf32, #tpu.memory_space<vmem>>, vector<2x16x64xf32>
    %30 = vector.shape_cast %29 : vector<2x16x64xf32> to vector<32x64xf32>
    %31 = arith.truncf %30 : vector<32x64xf32> to vector<32x64xbf16>
    %c4_26 = arith.constant 4 : index
    %c0_27 = arith.constant 0 : index
    %c0_28 = arith.constant 0 : index
    %32 = vector.load %arg2[%c4_26, %c0_27, %c0_28] : memref<5x64x128xbf16, #tpu.memory_space<vmem>>, vector<1x64x128xbf16>
    %33 = vector.shape_cast %32 : vector<1x64x128xbf16> to vector<64x128xbf16>
    %cst_29 = arith.constant dense<0.000000e+00> : vector<32x128xf32>
    %34 = tpu.matmul %31, %33, %cst_29 {dimension_numbers = #tpu.dot_dimension_numbers<[1], [0], [0], [1], [0, 0, 1, 1], [], []>} : vector<32x64xbf16>, vector<64x128xbf16>, vector<32x128xf32> -> vector<32x128xf32>
    %35 = arith.addf %28, %34 : vector<32x128xf32>
    %c0_30 = arith.constant 0 : index
    %c0_31 = arith.constant 0 : index
    %36 = vector.load %arg3[%c0_30, %c0_31] : memref<1x128xf32, #tpu.memory_space<vmem>>, vector<1x128xf32>
    %37 = vector.broadcast %36 : vector<1x128xf32> to vector<32x128xf32>
    %38 = arith.addf %35, %37 : vector<32x128xf32>
    %cst_32 = arith.constant 0.000000e+00 : f32
    %39 = vector.broadcast %cst_32 : f32 to vector<32x128xf32>
    %40 = arith.maximumf %38, %39 : vector<32x128xf32>
    %41 = vector.shape_cast %40 : vector<32x128xf32> to vector<2x16x128xf32>
    %c0_33 = arith.constant 0 : index
    %c0_34 = arith.constant 0 : index
    %42 = vector.load %arg4[%c0_33, %c0_34] : memref<16x128xf32, #tpu.memory_space<vmem>>, vector<16x128xf32>
    %43 = vector.shape_cast %42 : vector<16x128xf32> to vector<1x16x128xf32>
    %44 = vector.broadcast %43 : vector<1x16x128xf32> to vector<2x16x128xf32>
    %45 = arith.mulf %41, %44 : vector<2x16x128xf32>
    %cst_35 = arith.constant dense<0xFF800000> : vector<2x128xf32>
    %46 = vector.multi_reduction <maximumf>, %45, %cst_35 [1] : vector<2x16x128xf32> to vector<2x128xf32>
    %c0_36 = arith.constant 0 : index
    %c0_37 = arith.constant 0 : index
    %47 = vector.load %arg5[%c0_36, %c0_37] : memref<128x128xf32, #tpu.memory_space<vmem>>, vector<128x128xf32>
    %cst_38 = arith.constant dense<0.000000e+00> : vector<2x128xf32>
    %48 = tpu.matmul %46, %47, %cst_38 {dimension_numbers = #tpu.dot_dimension_numbers<[1], [0], [0], [1], [0, 0, 1, 1], [], []>} : vector<2x128xf32>, vector<128x128xf32>, vector<2x128xf32> -> vector<2x128xf32>
    %c0_39 = arith.constant 0 : index
    %c0_40 = arith.constant 0 : index
    %49 = vector.load %arg6[%c0_39, %c0_40] : memref<1x128xf32, #tpu.memory_space<vmem>>, vector<1x128xf32>
    %50 = vector.broadcast %49 : vector<1x128xf32> to vector<2x128xf32>
    %51 = arith.addf %48, %50 : vector<2x128xf32>
    %c0_41 = arith.constant 0 : index
    %c0_42 = arith.constant 0 : index
    %52 = vector.load %arg7[%c0_41, %c0_42] : memref<2x128xf32, #tpu.memory_space<vmem>>, vector<2x128xf32>
    tpu.vector_store %arg7[%c0_41, %c0_42], %51 {strides = array<i32>} : memref<2x128xf32, #tpu.memory_space<vmem>>, vector<2x128xf32>,
    return
  }
  func.func @transform_0(%arg0: i32) -> (i32, i32, i32) {
    %c0_i32 = arith.constant 0 : i32
    %c0_i32_0 = arith.constant 0 : i32
    %c0_i32_1 = arith.constant 0 : i32
    return %arg0, %c0_i32, %c0_i32_0 : i32, i32, i32
  }
  func.func @transform_1(%arg0: i32) -> (i32, i32, i32) {
    %c0_i32 = arith.constant 0 : i32
    %c0_i32_0 = arith.constant 0 : i32
    %c0_i32_1 = arith.constant 0 : i32
    %c0_i32_2 = arith.constant 0 : i32
    return %c0_i32, %c0_i32_0, %c0_i32_1 : i32, i32, i32
  }
  func.func @transform_2(%arg0: i32) -> (i32, i32) {
    %c0_i32 = arith.constant 0 : i32
    %c0_i32_0 = arith.constant 0 : i32
    %c0_i32_1 = arith.constant 0 : i32
    return %c0_i32, %c0_i32_0 : i32, i32
  }
  func.func @transform_3(%arg0: i32) -> (i32, i32) {
    %c0_i32 = arith.constant 0 : i32
    %c0_i32_0 = arith.constant 0 : i32
    %c0_i32_1 = arith.constant 0 : i32
    return %c0_i32, %c0_i32_0 : i32, i32
  }
  func.func @transform_4(%arg0: i32) -> (i32, i32) {
    %c0_i32 = arith.constant 0 : i32
    %c0_i32_0 = arith.constant 0 : i32
    %c0_i32_1 = arith.constant 0 : i32
    return %c0_i32, %c0_i32_0 : i32, i32
  }
  func.func @transform_5(%arg0: i32) -> (i32, i32) {
    %c0_i32 = arith.constant 0 : i32
    %c0_i32_0 = arith.constant 0 : i32
    %c0_i32_1 = arith.constant 0 : i32
    return %c0_i32, %c0_i32_0 : i32, i32
  }
  func.func @transform_6(%arg0: i32) -> (i32, i32) {
    %c0_i32 = arith.constant 0 : i32
    %c0_i32_0 = arith.constant 0 : i32
    return %arg0, %c0_i32 : i32, i32
  }
}

</mosaic_0001>

<llo_original>
// kernel: tpu_custom_call.1
$region0: #{tpu_custom_call.1}
  #allocation0 [shape = 'u32[]', space=smem, size = 0x4, offset = 0x4, fixed_abs, tag = 'smem constant byte address 0x4 - core index']
  #allocation1 [shape = 'u32[144,128]{1,0:T(1,128)}', space=vmem, size = 0x12000, scoped, tag = 'internal scratch']
  %s0 = inlined_call_operand.hbm [shape: f32[2,24,64], index: 0, kind: input, shape index: {}]
  %s1 = inlined_call_operand.hbm [shape: bf16[5,64,128], index: 1, kind: input, shape index: {}]
  %s2 = inlined_call_operand.vmem [shape: f32[1,128], index: 2, kind: input, shape index: {}]
  %s3 = inlined_call_operand.hbm [shape: f32[16,128], index: 3, kind: input, shape index: {}]
  %s4 = inlined_call_operand.hbm [shape: f32[128,128], index: 4, kind: input, shape index: {}]
  %s5 = inlined_call_operand.vmem [shape: f32[1,128], index: 5, kind: input, shape index: {}]
  %s6 = inlined_call_operand.hbm [shape: f32[2,128], index: 6, kind: output, shape index: {}]
  %s7 = sld [smem:[#allocation0]]
  $region50: #{tpu_custom_call.1} parent=0
    _
  %s9 = ssub.s32 1, %s7
  %s10 = scalar_select 0, %s9, %s7
  $region1: #{tpu_custom_call.1} parent=0
    #allocation2 [shape = 'u8[24576]{0}', space=vmem, size = 0x6000, scoped, tag = 'input window, operand 0, single buffered']
    #allocation3 [shape = 's32[1]{0}', space=sflag, size = 0x4, scoped, tag = 'scoped memory for tpu_custom_call.1']
    #allocation4 [shape = 's32[1]{0}', space=sflag, size = 0x4, scoped, tag = 'scoped memory for tpu_custom_call.1']
    #allocation5 [shape = 'u8[81920]{0}', space=vmem, size = 0x14000, scoped, tag = 'input window, operand 1, single buffered']
    #allocation6 [shape = 's32[1]{0}', space=sflag, size = 0x4, scoped, tag = 'scoped memory for tpu_custom_call.1']
    #allocation7 [shape = 'u8[8192]{0}', space=vmem, size = 0x2000, scoped, tag = 'input window, operand 3, single buffered']
    #allocation8 [shape = 'u8[65536]{0}', space=vmem, size = 0x10000, scoped, tag = 'input window, operand 4, single buffered']
    #allocation9 [shape = 's32[1]{0}', space=sflag, size = 0x4, scoped, tag = 'scoped memory for tpu_custom_call.1']
    #allocation10 [shape = 'u8[1024]{0}', space=vmem, size = 0x400, scoped, tag = 'output window, operand 0, single buffered']
    %11 = vsyncpa [#allocation3], 0
    %12 = vsyncpa [#allocation6], 0
    %13 = vsyncpa [#allocation9], 0
    %14 = vsyncpa [#allocation4], 0
    // Predicated region
    $region2: #{tpu_custom_call.1} parent=1 // pred_check
      _
    $region3: #{tpu_custom_call.1} parent=1 // pred_check_branch
      %16 = sbr.rel (0) target = $region5
    $region4: #{tpu_custom_call.1} parent=1 // pred_region
      %s18 = ssub.s32 768, 768
      %19 = vsyncadd [#allocation3], %s18
      %s20 = sshll.u32 [#allocation2], 4
      %s21 = int_to_ptr.vmem [resolvable:$true] %s20
      %26 = dma.hbm_to_vmem [thread:$0]  %s0, 768, %s21, [#allocation3], 128, 128, 8
    $region5: #{tpu_custom_call.1} parent=1 // pred_fallthru
      _
    // Predicated region
    $region6: #{tpu_custom_call.1} parent=1 // pred_check
      _
    $region7: #{tpu_custom_call.1} parent=1 // pred_check_branch
      %28 = sbr.rel (0) target = $region9
    $region8: #{tpu_custom_call.1} parent=1 // pred_region
      %s30 = ssub.s32 2560, 2560
      %31 = vsyncadd [#allocation6], %s30
      %s32 = sshll.u32 [#allocation5], 4
      %s33 = int_to_ptr.vmem [resolvable:$true] %s32
      %38 = dma.hbm_to_vmem [thread:$0]  %s1, 2560, %s33, [#allocation6], 64, 64, 4
    $region9: #{tpu_custom_call.1} parent=1 // pred_fallthru
      _
    // Predicated region
    $region10: #{tpu_custom_call.1} parent=1 // pred_check
      _
    $region11: #{tpu_custom_call.1} parent=1 // pred_check_branch
      %40 = sbr.rel (0) target = $region13
    $region12: #{tpu_custom_call.1} parent=1 // pred_region
      _
    $region13: #{tpu_custom_call.1} parent=1 // pred_fallthru
      _
    // Predicated region
    $region14: #{tpu_custom_call.1} parent=1 // pred_check
      _
    $region15: #{tpu_custom_call.1} parent=1 // pred_check_branch
      %42 = sbr.rel (0) target = $region17
    $region16: #{tpu_custom_call.1} parent=1 // pred_region
      %s44 = ssub.s32 256, 256
      %45 = vsyncadd [#allocation6], %s44
      %s46 = sshll.u32 [#allocation7], 4
      %s47 = int_to_ptr.vmem [resolvable:$true] %s46
      %52 = dma.hbm_to_vmem [thread:$0]  %s3, 256, %s47, [#allocation6], 128, 128, 8
    $region17: #{tpu_custom_call.1} parent=1 // pred_fallthru
      _
    // Predicated region
    $region18: #{tpu_custom_call.1} parent=1 // pred_check
      _
    $region19: #{tpu_custom_call.1} parent=1 // pred_check_branch
      %54 = sbr.rel (0) target = $region21
    $region20: #{tpu_custom_call.1} parent=1 // pred_region
      %s56 = ssub.s32 2048, 2048
      %57 = vsyncadd [#allocation9], %s56
      %s58 = sshll.u32 [#allocation8], 4
      %s59 = int_to_ptr.vmem [resolvable:$true] %s58
      %64 = dma.hbm_to_vmem [thread:$0]  %s4, 2048, %s59, [#allocation9], 128, 128, 8
    $region21: #{tpu_custom_call.1} parent=1 // pred_fallthru
      _
    // Predicated region
    $region22: #{tpu_custom_call.1} parent=1 // pred_check
      _
    $region23: #{tpu_custom_call.1} parent=1 // pred_check_branch
      %66 = sbr.rel (0) target = $region25
    $region24: #{tpu_custom_call.1} parent=1 // pred_region
      _
    $region25: #{tpu_custom_call.1} parent=1 // pred_fallthru
      _
    // Predicated region
    $region26: #{tpu_custom_call.1} parent=1 // pred_check
      _
    $region27: #{tpu_custom_call.1} parent=1 // pred_check_branch
      %68 = sbr.rel (0) target = $region29
    $region28: #{tpu_custom_call.1} parent=1 // pred_region
      %69 = dma.done [#allocation3], 768
    $region29: #{tpu_custom_call.1} parent=1 // pred_fallthru
      _
    // Predicated region
    $region30: #{tpu_custom_call.1} parent=1 // pred_check
      _
    $region31: #{tpu_custom_call.1} parent=1 // pred_check_branch
      %71 = sbr.rel (0) target = $region33
    $region32: #{tpu_custom_call.1} parent=1 // pred_region
      %72 = dma.done [#allocation6], 2560
    $region33: #{tpu_custom_call.1} parent=1 // pred_fallthru
      _
    // Predicated region
    $region34: #{tpu_custom_call.1} parent=1 // pred_check
      _
    $region35: #{tpu_custom_call.1} parent=1 // pred_check_branch
      %74 = sbr.rel (0) target = $region37
    $region36: #{tpu_custom_call.1} parent=1 // pred_region
      %75 = dma.done [#allocation6], 256
    $region37: #{tpu_custom_call.1} parent=1 // pred_fallthru
      _
    // Predicated region
    $region38: #{tpu_custom_call.1} parent=1 // pred_check
      _
    $region39: #{tpu_custom_call.1} parent=1 // pred_check_branch
      %77 = sbr.rel (0) target = $region41
    $region40: #{tpu_custom_call.1} parent=1 // pred_region
      %78 = dma.done [#allocation9], 2048
    $region41: #{tpu_custom_call.1} parent=1 // pred_fallthru
      _
    %v80 = vld [vmem:[#allocation2] sm:$0xff]
    %v81 = vld [vmem:[#allocation2 + $0x8] sm:$0xff]
    %v82 = vld [vmem:[#allocation2 + $0x18] sm:$0xff]
    %v83 = vld [vmem:[#allocation2 + $0x20] sm:$0xff]
    %v84 = vpack.c.bf16 %v81, %v80
    %v85 = vpack.c.bf16 %v83, %v82
    %v86 = vld [vmem:[#allocation5] sm:$0xf]
    %v87 = vld [vmem:[#allocation5 + $0x4] sm:$0xf]
    %v88 = vld [vmem:[#allocation5 + $0x8] sm:$0xf]
    %v89 = vld [vmem:[#allocation5 + $0xc] sm:$0xf]
    %v90 = vld [vmem:[#allocation5 + $0x10] sm:$0xf]
    %v91 = vld [vmem:[#allocation5 + $0x14] sm:$0xf]
    %v92 = vld [vmem:[#allocation5 + $0x18] sm:$0xf]
    %v93 = vld [vmem:[#allocation5 + $0x1c] sm:$0xf]
    %v94 = vld [vmem:[#allocation2 + $0x1] sm:$0xff]
    %v95 = vld [vmem:[#allocation2 + $0x9] sm:$0xff]
    %v96 = vld [vmem:[#allocation2 + $0x19] sm:$0xff]
    %v97 = vld [vmem:[#allocation2 + $0x21] sm:$0xff]
    %v98 = vpack.c.bf16 %v95, %v94
    %v99 = vpack.c.bf16 %v97, %v96
    %s100 = scalar_lea.vmem [#allocation5], 32
    %v101 = vld [vmem:[%s100] sm:$0xf]
    %v102 = vld [vmem:[%s100 + $0x4] sm:$0xf]
    %v103 = vld [vmem:[%s100 + $0x8] sm:$0xf]
    %v104 = vld [vmem:[%s100 + $0xc] sm:$0xf]
    %v105 = vld [vmem:[%s100 + $0x10] sm:$0xf]
    %v106 = vld [vmem:[%s100 + $0x14] sm:$0xf]
    %v107 = vld [vmem:[%s100 + $0x18] sm:$0xf]
    %v108 = vld [vmem:[%s100 + $0x1c] sm:$0xf]
    %v117 = vunpack.c.l.b16 %v101
    %v118 = vunpack.c.l.b16 %v102
    %v119 = vunpack.c.l.b16 %v103
    %v120 = vunpack.c.l.b16 %v104
    %v121 = vunpack.c.l.b16 %v105
    %v122 = vunpack.c.l.b16 %v106
    %v123 = vunpack.c.l.b16 %v107
    %v124 = vunpack.c.l.b16 %v108
    %v125 = vpack.c.b16 %v118, %v117
    %v126 = vpack.c.b16 %v120, %v119
    %v127 = vpack.c.b16 %v122, %v121
    %v128 = vpack.c.b16 %v124, %v123
    %vm133 = vcmask 523264
    %v135 = vsel %vm133, %v98, 0
    %v138 = vsel %vm133, %v99, 0
    %140 = vmatprep.subr.bf16.mxu0 0
    %141 = vmatpush1.bf16.msra.mxu0 %v125
    %142 = vmatprep.subr.bf16.mxu0 0
    %143 = vmatpush1.bf16.msra.mxu0 %v126
    %144 = vmatprep.subr.bf16.mxu0 0
    %145 = vmatpush1.bf16.msra.mxu0 %v127
    %146 = vmatprep.subr.bf16.mxu0 0
    %147 = vmatpush1.bf16.msra.mxu0 %v128
    %148 = vmatprep.subr.bf16.mxu0 0
    %149 = vmatpush1.bf16.msra.mxu0 0
    %150 = vmatprep.subr.bf16.mxu0 0
    %151 = vmatpush1.bf16.msra.mxu0 0
    %152 = vmatprep.subr.bf16.mxu0 0
    %153 = vmatpush1.bf16.msra.mxu0 0
    %154 = vmatprep.subr.bf16.mxu0 0
    %155 = vmatpush1.bf16.msra.mxu0 0
    %156 = vmatprep.subr.bf16.mxu0 0
    %157 = vmatpush1.bf16.msra.mxu0 0
    %158 = vmatprep.subr.bf16.mxu0 0
    %159 = vmatpush1.bf16.msra.mxu0 0
    %160 = vmatprep.subr.bf16.mxu0 0
    %161 = vmatpush1.bf16.msra.mxu0 0
    %162 = vmatprep.subr.bf16.mxu0 0
    %163 = vmatpush1.bf16.msra.mxu0 0
    %164 = vmatprep.subr.bf16.mxu0 0
    %165 = vmatpush1.bf16.msra.mxu0 0
    %166 = vmatprep.subr.bf16.mxu0 0
    %167 = vmatpush1.bf16.msra.mxu0 0
    %168 = vmatprep.subr.bf16.mxu0 0
    %169 = vmatpush1.bf16.msra.mxu0 0
    %170 = vmatprep.subr.bf16.mxu0 0
    %171 = vmatpush1.bf16.msra.mxu0 0
    %172 = vmatprep.mubr.bf16.mxu0 0
    %173 = vmatmul.mubr.bf16.gmra.mrb[0].mxu0 %v135
    %v174 = vpop.f32.mrb[0].mxu0
    %v175 = vadd.f32 0.0, %v174
    %v176 = vpop.f32.mrb[0].mxu0
    %v177 = vpop.f32.mrb[0].mxu0
    %v178 = vadd.f32 0.0, %v177
    %v179 = vpop.f32.mrb[0].mxu0
    %180 = vmatprep.mubr.bf16.mxu0 0
    %181 = vmatmul.mubr.bf16.gmra.mrb[0].mxu0 %v138
    %v182 = vpop.f32.mrb[0].mxu0
    %v183 = vadd.f32 0.0, %v182
    %v184 = vpop.f32.mrb[0].mxu0
    %v185 = vpop.f32.mrb[0].mxu0
    %v186 = vadd.f32 0.0, %v185
    %v187 = vpop.f32.mrb[0].mxu0
    %188 = vdwg.mxu0
    %v197 = vunpack.c.l.b16 %v86
    %v198 = vunpack.c.l.b16 %v87
    %v199 = vunpack.c.l.b16 %v88
    %v200 = vunpack.c.l.b16 %v89
    %v201 = vunpack.c.l.b16 %v90
    %v202 = vunpack.c.l.b16 %v91
    %v203 = vunpack.c.l.b16 %v92
    %v204 = vunpack.c.l.b16 %v93
    %v205 = vpack.c.b16 %v198, %v197
    %v206 = vpack.c.b16 %v200, %v199
    %v207 = vpack.c.b16 %v202, %v201
    %v208 = vpack.c.b16 %v204, %v203
    %v214 = vsel %vm133, %v84, 0
    %v217 = vsel %vm133, %v85, 0
    %219 = vmatprep.subr.bf16.mxu0 0
    %220 = vmatpush1.bf16.msra.mxu0 %v205
    %221 = vmatprep.subr.bf16.mxu0 0
    %222 = vmatpush1.bf16.msra.mxu0 %v206
    %223 = vmatprep.subr.bf16.mxu0 0
    %224 = vmatpush1.bf16.msra.mxu0 %v207
    %225 = vmatprep.subr.bf16.mxu0 0
    %226 = vmatpush1.bf16.msra.mxu0 %v208
    %227 = vmatprep.subr.bf16.mxu0 0
    %228 = vmatpush1.bf16.msra.mxu0 0
    %229 = vmatprep.subr.bf16.mxu0 0
    %230 = vmatpush1.bf16.msra.mxu0 0
    %231 = vmatprep.subr.bf16.mxu0 0
    %232 = vmatpush1.bf16.msra.mxu0 0
    %233 = vmatprep.subr.bf16.mxu0 0
    %234 = vmatpush1.bf16.msra.mxu0 0
    %235 = vmatprep.subr.bf16.mxu0 0
    %236 = vmatpush1.bf16.msra.mxu0 0
    %237 = vmatprep.subr.bf16.mxu0 0
    %238 = vmatpush1.bf16.msra.mxu0 0
    %239 = vmatprep.subr.bf16.mxu0 0
    %240 = vmatpush1.bf16.msra.mxu0 0
    %241 = vmatprep.subr.bf16.mxu0 0
    %242 = vmatpush1.bf16.msra.mxu0 0
    %243 = vmatprep.subr.bf16.mxu0 0
    %244 = vmatpush1.bf16.msra.mxu0 0
    %245 = vmatprep.subr.bf16.mxu0 0
    %246 = vmatpush1.bf16.msra.mxu0 0
    %247 = vmatprep.subr.bf16.mxu0 0
    %248 = vmatpush1.bf16.msra.mxu0 0
    %249 = vmatprep.subr.bf16.mxu0 0
    %250 = vmatpush1.bf16.msra.mxu0 0
    %251 = vmatprep.mubr.bf16.mxu0 0
    %252 = vmatmul.mubr.bf16.gmra.mrb[0].mxu0 %v214
    %v253 = vpop.f32.mrb[0].mxu0
    %v254 = vadd.f32 %v175, %v253
    %v255 = vpop.f32.mrb[0].mxu0
    %v256 = vpop.f32.mrb[0].mxu0
    %v257 = vadd.f32 %v178, %v256
    %v258 = vpop.f32.mrb[0].mxu0
    %259 = vmatprep.mubr.bf16.mxu0 0
    %260 = vmatmul.mubr.bf16.gmra.mrb[0].mxu0 %v217
    %v261 = vpop.f32.mrb[0].mxu0
    %v262 = vadd.f32 %v183, %v261
    %v263 = vpop.f32.mrb[0].mxu0
    %v264 = vpop.f32.mrb[0].mxu0
    %v265 = vadd.f32 %v186, %v264
    %v266 = vpop.f32.mrb[0].mxu0
    %267 = vdwg.mxu0
    %v268 = vld [vmem:[#allocation2 + $0x2] sm:$0xff]
    %v269 = vld [vmem:[#allocation2 + $0xa] sm:$0xff]
    %v270 = vld [vmem:[#allocation2 + $0x1a] sm:$0xff]
    %v271 = vld [vmem:[#allocation2 + $0x22] sm:$0xff]
    %v272 = vpack.c.bf16 %v269, %v268
    %v273 = vpack.c.bf16 %v271, %v270
    %s274 = scalar_lea.vmem [#allocation5], 64
    %v275 = vld [vmem:[%s274] sm:$0xf]
    %v276 = vld [vmem:[%s274 + $0x4] sm:$0xf]
    %v277 = vld [vmem:[%s274 + $0x8] sm:$0xf]
    %v278 = vld [vmem:[%s274 + $0xc] sm:$0xf]
    %v279 = vld [vmem:[%s274 + $0x10] sm:$0xf]
    %v280 = vld [vmem:[%s274 + $0x14] sm:$0xf]
    %v281 = vld [vmem:[%s274 + $0x18] sm:$0xf]
    %v282 = vld [vmem:[%s274 + $0x1c] sm:$0xf]
    %v291 = vunpack.c.l.b16 %v275
    %v292 = vunpack.c.l.b16 %v276
    %v293 = vunpack.c.l.b16 %v277
    %v294 = vunpack.c.l.b16 %v278
    %v295 = vunpack.c.l.b16 %v279
    %v296 = vunpack.c.l.b16 %v280
    %v297 = vunpack.c.l.b16 %v281
    %v298 = vunpack.c.l.b16 %v282
    %v299 = vpack.c.b16 %v292, %v291
    %v300 = vpack.c.b16 %v294, %v293
    %v301 = vpack.c.b16 %v296, %v295
    %v302 = vpack.c.b16 %v298, %v297
    %v308 = vsel %vm133, %v272, 0
    %v311 = vsel %vm133, %v273, 0
    %313 = vmatprep.subr.bf16.mxu0 0
    %314 = vmatpush1.bf16.msra.mxu0 %v299
    %315 = vmatprep.subr.bf16.mxu0 0
    %316 = vmatpush1.bf16.msra.mxu0 %v300
    %317 = vmatprep.subr.bf16.mxu0 0
    %318 = vmatpush1.bf16.msra.mxu0 %v301
    %319 = vmatprep.subr.bf16.mxu0 0
    %320 = vmatpush1.bf16.msra.mxu0 %v302
    %321 = vmatprep.subr.bf16.mxu0 0
    %322 = vmatpush1.bf16.msra.mxu0 0
    %323 = vmatprep.subr.bf16.mxu0 0
    %324 = vmatpush1.bf16.msra.mxu0 0
    %325 = vmatprep.subr.bf16.mxu0 0
    %326 = vmatpush1.bf16.msra.mxu0 0
    %327 = vmatprep.subr.bf16.mxu0 0
    %328 = vmatpush1.bf16.msra.mxu0 0
    %329 = vmatprep.subr.bf16.mxu0 0
    %330 = vmatpush1.bf16.msra.mxu0 0
    %331 = vmatprep.subr.bf16.mxu0 0
    %332 = vmatpush1.bf16.msra.mxu0 0
    %333 = vmatprep.subr.bf16.mxu0 0
    %334 = vmatpush1.bf16.msra.mxu0 0
    %335 = vmatprep.subr.bf16.mxu0 0
    %336 = vmatpush1.bf16.msra.mxu0 0
    %337 = vmatprep.subr.bf16.mxu0 0
    %338 = vmatpush1.bf16.msra.mxu0 0
    %339 = vmatprep.subr.bf16.mxu0 0
    %340 = vmatpush1.bf16.msra.mxu0 0
    %341 = vmatprep.subr.bf16.mxu0 0
    %342 = vmatpush1.bf16.msra.mxu0 0
    %343 = vmatprep.subr.bf16.mxu0 0
    %344 = vmatpush1.bf16.msra.mxu0 0
    %345 = vmatprep.mubr.bf16.mxu0 0
    %346 = vmatmul.mubr.bf16.gmra.mrb[0].mxu0 %v308
    %v347 = vpop.f32.mrb[0].mxu0
    %v348 = vadd.f32 0.0, %v347
    %v349 = vpop.f32.mrb[0].mxu0
    %v350 = vpop.f32.mrb[0].mxu0
    %v351 = vadd.f32 0.0, %v350
    %v352 = vpop.f32.mrb[0].mxu0
    %353 = vmatprep.mubr.bf16.mxu0 0
    %354 = vmatmul.mubr.bf16.gmra.mrb[0].mxu0 %v311
    %v355 = vpop.f32.mrb[0].mxu0
    %v356 = vadd.f32 0.0, %v355
    %v357 = vpop.f32.mrb[0].mxu0
    %v358 = vpop.f32.mrb[0].mxu0
    %v359 = vadd.f32 0.0, %v358
    %v360 = vpop.f32.mrb[0].mxu0
    %361 = vdwg.mxu0
    %v362 = vadd.f32 %v254, %v348
    %v363 = vadd.f32 %v257, %v351
    %v364 = vadd.f32 %v262, %v356
    %v365 = vadd.f32 %v265, %v359
    %v366 = vld [vmem:[#allocation2 + $0x3] sm:$0xff]
    %v367 = vld [vmem:[#allocation2 + $0xb] sm:$0xff]
    %v368 = vld [vmem:[#allocation2 + $0x1b] sm:$0xff]
    %v369 = vld [vmem:[#allocation2 + $0x23] sm:$0xff]
    %v370 = vpack.c.bf16 %v367, %v366
    %v371 = vpack.c.bf16 %v369, %v368
    %s372 = scalar_lea.vmem [#allocation5], 96
    %v373 = vld [vmem:[%s372] sm:$0xf]
    %v374 = vld [vmem:[%s372 + $0x4] sm:$0xf]
    %v375 = vld [vmem:[%s372 + $0x8] sm:$0xf]
    %v376 = vld [vmem:[%s372 + $0xc] sm:$0xf]
    %v377 = vld [vmem:[%s372 + $0x10] sm:$0xf]
    %v378 = vld [vmem:[%s372 + $0x14] sm:$0xf]
    %v379 = vld [vmem:[%s372 + $0x18] sm:$0xf]
    %v380 = vld [vmem:[%s372 + $0x1c] sm:$0xf]
    %v389 = vunpack.c.l.b16 %v373
    %v390 = vunpack.c.l.b16 %v374
    %v391 = vunpack.c.l.b16 %v375
    %v392 = vunpack.c.l.b16 %v376
    %v393 = vunpack.c.l.b16 %v377
    %v394 = vunpack.c.l.b16 %v378
    %v395 = vunpack.c.l.b16 %v379
    %v396 = vunpack.c.l.b16 %v380
    %v397 = vpack.c.b16 %v390, %v389
    %v398 = vpack.c.b16 %v392, %v391
    %v399 = vpack.c.b16 %v394, %v393
    %v400 = vpack.c.b16 %v396, %v395
    %v406 = vsel %vm133, %v370, 0
    %v409 = vsel %vm133, %v371, 0
    %411 = vmatprep.subr.bf16.mxu0 0
    %412 = vmatpush1.bf16.msra.mxu0 %v397
    %413 = vmatprep.subr.bf16.mxu0 0
    %414 = vmatpush1.bf16.msra.mxu0 %v398
    %415 = vmatprep.subr.bf16.mxu0 0
    %416 = vmatpush1.bf16.msra.mxu0 %v399
    %417 = vmatprep.subr.bf16.mxu0 0
    %418 = vmatpush1.bf16.msra.mxu0 %v400
    %419 = vmatprep.subr.bf16.mxu0 0
    %420 = vmatpush1.bf16.msra.mxu0 0
    %421 = vmatprep.subr.bf16.mxu0 0
    %422 = vmatpush1.bf16.msra.mxu0 0
    %423 = vmatprep.subr.bf16.mxu0 0
    %424 = vmatpush1.bf16.msra.mxu0 0
    %425 = vmatprep.subr.bf16.mxu0 0
    %426 = vmatpush1.bf16.msra.mxu0 0
    %427 = vmatprep.subr.bf16.mxu0 0
    %428 = vmatpush1.bf16.msra.mxu0 0
    %429 = vmatprep.subr.bf16.mxu0 0
    %430 = vmatpush1.bf16.msra.mxu0 0
    %431 = vmatprep.subr.bf16.mxu0 0
    %432 = vmatpush1.bf16.msra.mxu0 0
    %433 = vmatprep.subr.bf16.mxu0 0
    %434 = vmatpush1.bf16.msra.mxu0 0
    %435 = vmatprep.subr.bf16.mxu0 0
    %436 = vmatpush1.bf16.msra.mxu0 0
    %437 = vmatprep.subr.bf16.mxu0 0
    %438 = vmatpush1.bf16.msra.mxu0 0
    %439 = vmatprep.subr.bf16.mxu0 0
    %440 = vmatpush1.bf16.msra.mxu0 0
    %441 = vmatprep.subr.bf16.mxu0 0
    %442 = vmatpush1.bf16.msra.mxu0 0
    %443 = vmatprep.mubr.bf16.mxu0 0
    %444 = vmatmul.mubr.bf16.gmra.mrb[0].mxu0 %v406
    %v445 = vpop.f32.mrb[0].mxu0
    %v446 = vadd.f32 0.0, %v445
    %v447 = vpop.f32.mrb[0].mxu0
    %v448 = vpop.f32.mrb[0].mxu0
    %v449 = vadd.f32 0.0, %v448
    %v450 = vpop.f32.mrb[0].mxu0
    %451 = vmatprep.mubr.bf16.mxu0 0
    %452 = vmatmul.mubr.bf16.gmra.mrb[0].mxu0 %v409
    %v453 = vpop.f32.mrb[0].mxu0
    %v454 = vadd.f32 0.0, %v453
    %v455 = vpop.f32.mrb[0].mxu0
    %v456 = vpop.f32.mrb[0].mxu0
    %v457 = vadd.f32 0.0, %v456
    %v458 = vpop.f32.mrb[0].mxu0
    %459 = vdwg.mxu0
    %v460 = vadd.f32 %v362, %v446
    %v461 = vadd.f32 %v363, %v449
    %v462 = vadd.f32 %v364, %v454
    %v463 = vadd.f32 %v365, %v457
    %v464 = vld [vmem:[#allocation2 + $0x4] sm:$0xff]
    %v465 = vld [vmem:[#allocation2 + $0xc] sm:$0xff]
    %v466 = vld [vmem:[#allocation2 + $0x1c] sm:$0xff]
    %v467 = vld [vmem:[#allocation2 + $0x24] sm:$0xff]
    %v468 = vpack.c.bf16 %v465, %v464
    %v469 = vpack.c.bf16 %v467, %v466
    %s470 = scalar_lea.vmem [#allocation5], 128
    %v471 = vld [vmem:[%s470] sm:$0xf]
    %v472 = vld [vmem:[%s470 + $0x4] sm:$0xf]
    %v473 = vld [vmem:[%s470 + $0x8] sm:$0xf]
    %v474 = vld [vmem:[%s470 + $0xc] sm:$0xf]
    %v475 = vld [vmem:[%s470 + $0x10] sm:$0xf]
    %v476 = vld [vmem:[%s470 + $0x14] sm:$0xf]
    %v477 = vld [vmem:[%s470 + $0x18] sm:$0xf]
    %v478 = vld [vmem:[%s470 + $0x1c] sm:$0xf]
    %v487 = vunpack.c.l.b16 %v471
    %v488 = vunpack.c.l.b16 %v472
    %v489 = vunpack.c.l.b16 %v473
    %v490 = vunpack.c.l.b16 %v474
    %v491 = vunpack.c.l.b16 %v475
    %v492 = vunpack.c.l.b16 %v476
    %v493 = vunpack.c.l.b16 %v477
    %v494 = vunpack.c.l.b16 %v478
    %v495 = vpack.c.b16 %v488, %v487
    %v496 = vpack.c.b16 %v490, %v489
    %v497 = vpack.c.b16 %v492, %v491
    %v498 = vpack.c.b16 %v494, %v493
    %v504 = vsel %vm133, %v468, 0
    %v507 = vsel %vm133, %v469, 0
    %509 = vmatprep.subr.bf16.mxu0 0
    %510 = vmatpush1.bf16.msra.mxu0 %v495
    %511 = vmatprep.subr.bf16.mxu0 0
    %512 = vmatpush1.bf16.msra.mxu0 %v496
    %513 = vmatprep.subr.bf16.mxu0 0
    %514 = vmatpush1.bf16.msra.mxu0 %v497
    %515 = vmatprep.subr.bf16.mxu0 0
    %516 = vmatpush1.bf16.msra.mxu0 %v498
    %517 = vmatprep.subr.bf16.mxu0 0
    %518 = vmatpush1.bf16.msra.mxu0 0
    %519 = vmatprep.subr.bf16.mxu0 0
    %520 = vmatpush1.bf16.msra.mxu0 0
    %521 = vmatprep.subr.bf16.mxu0 0
    %522 = vmatpush1.bf16.msra.mxu0 0
    %523 = vmatprep.subr.bf16.mxu0 0
    %524 = vmatpush1.bf16.msra.mxu0 0
    %525 = vmatprep.subr.bf16.mxu0 0
    %526 = vmatpush1.bf16.msra.mxu0 0
    %527 = vmatprep.subr.bf16.mxu0 0
    %528 = vmatpush1.bf16.msra.mxu0 0
    %529 = vmatprep.subr.bf16.mxu0 0
    %530 = vmatpush1.bf16.msra.mxu0 0
    %531 = vmatprep.subr.bf16.mxu0 0
    %532 = vmatpush1.bf16.msra.mxu0 0
    %533 = vmatprep.subr.bf16.mxu0 0
    %534 = vmatpush1.bf16.msra.mxu0 0
    %535 = vmatprep.subr.bf16.mxu0 0
    %536 = vmatpush1.bf16.msra.mxu0 0
    %537 = vmatprep.subr.bf16.mxu0 0
    %538 = vmatpush1.bf16.msra.mxu0 0
    %539 = vmatprep.subr.bf16.mxu0 0
    %540 = vmatpush1.bf16.msra.mxu0 0
    %541 = vmatprep.mubr.bf16.mxu0 0
    %542 = vmatmul.mubr.bf16.gmra.mrb[0].mxu0 %v504
    %v543 = vpop.f32.mrb[0].mxu0
    %v544 = vadd.f32 0.0, %v543
    %v545 = vpop.f32.mrb[0].mxu0
    %v546 = vpop.f32.mrb[0].mxu0
    %v547 = vadd.f32 0.0, %v546
    %v548 = vpop.f32.mrb[0].mxu0
    %549 = vmatprep.mubr.bf16.mxu0 0
    %550 = vmatmul.mubr.bf16.gmra.mrb[0].mxu0 %v507
    %v551 = vpop.f32.mrb[0].mxu0
    %v552 = vadd.f32 0.0, %v551
    %v553 = vpop.f32.mrb[0].mxu0
    %v554 = vpop.f32.mrb[0].mxu0
    %v555 = vadd.f32 0.0, %v554
    %v556 = vpop.f32.mrb[0].mxu0
    %557 = vdwg.mxu0
    %v558 = vadd.f32 %v460, %v544
    %v559 = vadd.f32 %v461, %v547
    %v560 = vadd.f32 %v462, %v552
    %v561 = vadd.f32 %v463, %v555
    %v562 = vld [vmem:[%s2] sm:$0x1]
    %v564 = vlaneseq
    %v565 = vshrl.u32 %v564, 7
    %v566 = vsub.s32 0, %v565
    %v567 = vrot.slane %v562, %v566
    %v569 = vadd.f32 %v558, %v567
    %v570 = vadd.f32 %v559, %v567
    %v571 = vadd.f32 %v560, %v567
    %v572 = vadd.f32 %v561, %v567
    %v573 = vmax.f32 %v569, 0.0
    %v574 = vmax.f32 %v570, 0.0
    %v575 = vmax.f32 %v571, 0.0
    %v576 = vmax.f32 %v572, 0.0
    %v577 = vld [vmem:[#allocation7] sm:$0xff]
    %v578 = vld [vmem:[#allocation7 + $0x8] sm:$0xff]
    %v579 = vmul.f32 %v573, %v577
    %v580 = vmul.f32 %v574, %v578
    %v581 = vmul.f32 %v575, %v577
    %v582 = vmul.f32 %v576, %v578
    %v583 = vmax.f32 %v579, %v580
    %v584 = vrot.slane %v583, 4
    %v585 = vmax.f32 %v583, %v584
    %v586 = vrot.slane %v585, 2
    %v587 = vmax.f32 %v585, %v586
    %v588 = vrot.slane %v587, 1
    %v589 = vmax.f32 %v587, %v588
    %v590 = vmax.f32 %v581, %v582
    %v591 = vrot.slane %v590, 4
    %v592 = vmax.f32 %v590, %v591
    %v593 = vrot.slane %v592, 2
    %v594 = vmax.f32 %v592, %v593
    %v595 = vrot.slane %v594, 1
    %v596 = vmax.f32 %v594, %v595
    %v597 = vld [vmem:[#allocation8] sm:$0xff]
    %v598 = vld [vmem:[#allocation8 + $0x8] sm:$0xff]
    %v599 = vld [vmem:[#allocation8 + $0x10] sm:$0xff]
    %v600 = vld [vmem:[#allocation8 + $0x18] sm:$0xff]
    %v601 = vld [vmem:[#allocation8 + $0x20] sm:$0xff]
    %v602 = vld [vmem:[#allocation8 + $0x28] sm:$0xff]
    %v603 = vld [vmem:[#allocation8 + $0x30] sm:$0xff]
    %v604 = vld [vmem:[#allocation8 + $0x38] sm:$0xff]
    %v605 = vld [vmem:[#allocation8 + $0x40] sm:$0xff]
    %v606 = vld [vmem:[#allocation8 + $0x48] sm:$0xff]
    %v607 = vld [vmem:[#allocation8 + $0x50] sm:$0xff]
    %v608 = vld [vmem:[#allocation8 + $0x58] sm:$0xff]
    %v609 = vld [vmem:[#allocation8 + $0x60] sm:$0xff]
    %v610 = vld [vmem:[#allocation8 + $0x68] sm:$0xff]
    %v611 = vld [vmem:[#allocation8 + $0x70] sm:$0xff]
    %v612 = vld [vmem:[#allocation8 + $0x78] sm:$0xff]
    %v613 = vld [vmem:[%s5] sm:$0x1]
    %v615 = vlaneseq
    %v616 = vshrl.u32 %v615, 7
    %v617 = vsub.s32 0, %v616
    %v618 = vrot.slane %v613, %v617
    %vm622 = vcmask 1041409
    %v623 = vsel %vm622, %v596, %v589
    %625 = vmatprep.subr.mxu0 0.0
    %626 = vmatpush1.msra.mxu0 %v597
    %627 = vmatprep.subr.mxu0 0.0
    %628 = vmatpush1.msra.mxu0 %v598
    %629 = vmatprep.subr.mxu0 0.0
    %630 = vmatpush1.msra.mxu0 %v599
    %631 = vmatprep.subr.mxu0 0.0
    %632 = vmatpush1.msra.mxu0 %v600
    %633 = vmatprep.subr.mxu0 0.0
    %634 = vmatpush1.msra.mxu0 %v601
    %635 = vmatprep.subr.mxu0 0.0
    %636 = vmatpush1.msra.mxu0 %v602
    %637 = vmatprep.subr.mxu0 0.0
    %638 = vmatpush1.msra.mxu0 %v603
    %639 = vmatprep.subr.mxu0 0.0
    %640 = vmatpush1.msra.mxu0 %v604
    %641 = vmatprep.subr.mxu0 0.0
    %642 = vmatpush1.msra.mxu0 %v605
    %643 = vmatprep.subr.mxu0 0.0
    %644 = vmatpush1.msra.mxu0 %v606
    %645 = vmatprep.subr.mxu0 0.0
    %646 = vmatpush1.msra.mxu0 %v607
    %647 = vmatprep.subr.mxu0 0.0
    %648 = vmatpush1.msra.mxu0 %v608
    %649 = vmatprep.subr.mxu0 0.0
    %650 = vmatpush1.msra.mxu0 %v609
    %651 = vmatprep.subr.mxu0 0.0
    %652 = vmatpush1.msra.mxu0 %v610
    %653 = vmatprep.subr.mxu0 0.0
    %654 = vmatpush1.msra.mxu0 %v611
    %655 = vmatprep.subr.mxu0 0.0
    %656 = vmatpush1.msra.mxu0 %v612
    %657 = vmatprep.subr.mxu0 0.0
    %658 = vmatpush1.msra.mxu0 0.0
    %659 = vmatprep.subr.mxu0 0.0
    %660 = vmatpush1.msra.mxu0 0.0
    %661 = vmatprep.subr.mxu0 0.0
    %662 = vmatpush1.msra.mxu0 0.0
    %663 = vmatprep.subr.mxu0 0.0
    %664 = vmatpush1.msra.mxu0 0.0
    %665 = vmatprep.subr.mxu0 0.0
    %666 = vmatpush1.msra.mxu0 0.0
    %667 = vmatprep.subr.mxu0 0.0
    %668 = vmatpush1.msra.mxu0 0.0
    %669 = vmatprep.subr.mxu0 0.0
    %670 = vmatpush1.msra.mxu0 0.0
    %671 = vmatprep.subr.mxu0 0.0
    %672 = vmatpush1.msra.mxu0 0.0
    %673 = vmatprep.subr.mxu0 0.0
    %674 = vmatpush1.msra.mxu0 0.0
    %675 = vmatprep.subr.mxu0 0.0
    %676 = vmatpush1.msra.mxu0 0.0
    %677 = vmatprep.subr.mxu0 0.0
    %678 = vmatpush1.msra.mxu0 0.0
    %679 = vmatprep.subr.mxu0 0.0
    %680 = vmatpush1.msra.mxu0 0.0
    %681 = vmatprep.subr.mxu0 0.0
    %682 = vmatpush1.msra.mxu0 0.0
    %683 = vmatprep.subr.mxu0 0.0
    %684 = vmatpush1.msra.mxu0 0.0
    %685 = vmatprep.subr.mxu0 0.0
    %686 = vmatpush1.msra.mxu0 0.0
    %687 = vmatprep.subr.mxu0 0.0
    %688 = vmatpush1.msra.mxu0 0.0
    %689 = vmatprep.mubr.f32.mxu0 0.0
    %690 = vmatmul.mubr.f32.gmra.mrb[0].mxu0 %v623
    %v691 = vpop.f32.mrb[0].mxu0
    %v692 = vadd.f32 %v618, %v691
    %v693 = vpop.f32.mrb[0].mxu0
    %694 = vdwg.mxu0
    %695 = vst [vmem:[#allocation10] sm:$0x3] %v692
    // Predicated region
    $region42: #{tpu_custom_call.1} parent=1 // pred_check
      _
    $region43: #{tpu_custom_call.1} parent=1 // pred_check_branch
      %697 = sbr.rel (0) target = $region45
    $region44: #{tpu_custom_call.1} parent=1 // pred_region
      %s699 = ssub.s32 32, 32
      %700 = vsyncadd [#allocation4], %s699
      %s702 = sshll.u32 [#allocation10], 4
      %s703 = int_to_ptr.vmem [resolvable:$true] %s702
      %705 = dma.vmem_to_hbm [thread:$0]  %s703, 32, %s6, [#allocation4]
    $region45: #{tpu_custom_call.1} parent=1 // pred_fallthru
      _
    // Predicated region
    $region46: #{tpu_custom_call.1} parent=1 // pred_check
      _
    $region47: #{tpu_custom_call.1} parent=1 // pred_check_branch
      %707 = sbr.rel (0) target = $region49
    $region48: #{tpu_custom_call.1} parent=1 // pred_region
      %708 = dma.done [#allocation4], 32
    $region49: #{tpu_custom_call.1} parent=1 // pred_fallthru
      _
    %709 = vsyncpa [#allocation3], 1
    %710 = vsyncpa [#allocation6], 1
    %711 = vsyncpa [#allocation9], 1
    %712 = vsyncpa [#allocation4], 1

</llo_original>
